<compile_context>
chip_gen: v7x
topology: tpu7x:2x2x1
jax: 0.10.0
libtpu: 0.0.40
codegen_flags: <defaults>
</compile_context>

<pallas_src>
import functools

import jax
import jax.numpy as jnp
from jax.experimental import pallas as pl
from jax.experimental.pallas import tpu as pltpu

HIDDEN = 128        # fc1/fc2 width (fixed by the PyTorch module)
LANE = 128          # lane width for the padded, lane-dense fc3 output
MAX_TILE_B = 1024   # upper bound on batch rows per grid step


def _round_up(x: int, m: int) -> int:
    return pl.cdiv(x, m) * m


def _choose_tiling(B: int):
    """Pick (tile_b, b_pad).  B is static under jit (comes from x.shape)."""
    if B <= 128:
        # Latency path (DQN action selection): single grid step, minimal padding.
        tile = max(8, _round_up(B, 8))
        return tile, tile
    # Throughput path: biggest tile (<= MAX_TILE_B, multiple of 128) that still
    # leaves >= 2 grid steps so ("parallel",) can shard across v7x's 2 TCs and
    # the M edge is >= 256 for the 256x256 MXUs on v6e/v7x whenever possible.
    b_pad = _round_up(B, 128)
    tile = MAX_TILE_B
    while tile > 128 and b_pad < 2 * tile:
        tile //= 2
    b_pad = _round_up(B, tile)
    return tile, b_pad


def dqn_kernel(x_ref, w1_ref, b1_ref, w2_ref, b2_ref, w3_ref, b3_ref, o_ref):
    # fc1 + bias + ReLU   (bf16 MXU inputs, f32 accumulation / elementwise)
    h1 = jnp.dot(x_ref[...], w1_ref[...], preferred_element_type=jnp.float32)
    h1 = jnp.maximum(h1 + b1_ref[...], 0.0)
    # dropout1 = identity (eval mode)

    # fc2 + bias + ReLU
    h2 = jnp.dot(h1.astype(jnp.bfloat16), w2_ref[...],
                 preferred_element_type=jnp.float32)
    h2 = jnp.maximum(h2 + b2_ref[...], 0.0)
    # dropout2 = identity (eval mode)

    # fc3 (Q-values) into a lane-dense 128-wide padded slab, stored as bf16
    q = jnp.dot(h2.astype(jnp.bfloat16), w3_ref[...],
                preferred_element_type=jnp.float32)
    o_ref[...] = (q + b3_ref[...]).astype(o_ref.dtype)


@functools.partial(jax.jit, static_argnames=("action_size",))
def dqn_forward(x, params, *, action_size):
    """x: [B, state_size] float32.  params: output of prepare_params() (bf16, pre-padded)."""
    B, state_size = x.shape
    n_pad = params["w3"].shape[1]            # already padded to a multiple of 128

    tile_b, b_pad = _choose_tiling(B)

    x_p = x if b_pad == B else jnp.pad(x, ((0, b_pad - B), (0, 0)))
    x_bf = x_p.astype(jnp.bfloat16)

    w1, b1 = params["w1"], params["b1"]
    w2, b2 = params["w2"], params["b2"]
    w3, b3 = params["w3"], params["b3"]

    grid = (b_pad // tile_b,)

    # Weights/biases: constant index_map -> VMEM-resident across all grid steps.
    const2d = lambda a: pl.BlockSpec(a.shape, lambda i: (0, 0))

    flops = 2 * b_pad * (state_size * HIDDEN + HIDDEN * HIDDEN + HIDDEN * n_pad)
    bytes_accessed = (
        x_bf.size * 2
        + (w1.size + w2.size + w3.size) * 2
        + (b1.size + b2.size + b3.size) * 4
        + b_pad * n_pad * 2                      # bf16 output slab
    )

    out_padded = pl.pallas_call(
        dqn_kernel,
        out_shape=jax.ShapeDtypeStruct((b_pad, n_pad), jnp.bfloat16),
        grid=grid,
        in_specs=[
            pl.BlockSpec((tile_b, state_size), lambda i: (i, 0)),  # x tile
            const2d(w1), const2d(b1),
            const2d(w2), const2d(b2),
            const2d(w3), const2d(b3),
        ],
        out_specs=pl.BlockSpec((tile_b, n_pad), lambda i: (i, 0)),
        compiler_params=pltpu.CompilerParams(
            dimension_semantics=("parallel",),
        ),
        cost_estimate=pl.CostEstimate(
            flops=int(flops), transcendentals=0, bytes_accessed=int(bytes_accessed)
        ),
    )(x_bf, w1, b1, w2, b2, w3, b3)

    return out_padded[:B, :action_size].astype(jnp.float32)


def init_params(key, state_size, action_size, hidden=HIDDEN):
    """Deterministic synthetic init (uniform, PyTorch-Linear-like bounds), f32."""
    ks = jax.random.split(key, 6)

    def lin(kw, kb, fan_in, fan_out):
        bound = 1.0 / jnp.sqrt(fan_in)
        # stored as [in, out] (already transposed relative to PyTorch's [out, in])
        w = jax.random.uniform(kw, (fan_in, fan_out), jnp.float32, -bound, bound)
        b = jax.random.uniform(kb, (1, fan_out), jnp.float32, -bound, bound)
        return w, b

    w1, b1 = lin(ks[0], ks[1], state_size, hidden)
    w2, b2 = lin(ks[2], ks[3], hidden, hidden)
    w3, b3 = lin(ks[4], ks[5], hidden, action_size)
    return {"w1": w1, "b1": b1, "w2": w2, "b2": b2, "w3": w3, "b3": b3}


def prepare_params(raw):
    """One-time conversion: bf16 MXU weights, fc3 zero-padded to a lane-dense 128-wide slab."""
    action_size = raw["w3"].shape[1]
    n_pad = max(LANE, _round_up(action_size, LANE))
    pad_n = n_pad - action_size
    return {
        "w1": raw["w1"].astype(jnp.bfloat16),
        "b1": raw["b1"].astype(jnp.float32),
        "w2": raw["w2"].astype(jnp.bfloat16),
        "b2": raw["b2"].astype(jnp.float32),
        "w3": jnp.pad(raw["w3"], ((0, 0), (0, pad_n))).astype(jnp.bfloat16),
        "b3": jnp.pad(raw["b3"], ((0, 0), (0, pad_n))).astype(jnp.float32),
    }


def dqn_reference(x, p):
    """Pure-JAX reference mimicking the kernel: bf16 MXU inputs, f32 accum, bf16 output."""
    f = lambda a: a.astype(jnp.bfloat16).astype(jnp.float32)
    h1 = jnp.maximum(f(x) @ f(p["w1"]) + p["b1"], 0.0)
    h2 = jnp.maximum(f(h1) @ f(p["w2"]) + p["b2"], 0.0)
    q = f(h2) @ f(p["w3"]) + p["b3"]
    return q.astype(jnp.bfloat16).astype(jnp.float32)


if __name__ == "__main__":
    key = jax.random.PRNGKey(0)
    k_x, k_p = jax.random.split(key)

    batch, state_size, action_size = 2, 16, 8
    raw = init_params(k_p, state_size, action_size)
    params = prepare_params(raw)

    # Latency path (single-state style inference).
    x = jax.random.normal(k_x, (batch, state_size), jnp.float32)
    out = jax.block_until_ready(dqn_forward(x, params, action_size=action_size))
    ref = dqn_reference(x, raw)
    assert out.shape == (batch, action_size), out.shape
    assert jnp.allclose(out, ref, atol=2e-2, rtol=2e-2), "small-batch mismatch vs JAX reference"

    # Throughput path (replay-buffer-sized batch, exercises multi-step grid + padding).
    xb = jax.random.normal(k_x, (600, state_size), jnp.float32)
    outb = jax.block_until_ready(dqn_forward(xb, params, action_size=action_size))
    refb = dqn_reference(xb, raw)
    assert outb.shape == (600, action_size), outb.shape
    assert jnp.allclose(outb, refb, atol=2e-2, rtol=2e-2), "large-batch mismatch vs JAX reference"

    print("KERNEL_OK")
</pallas_src>

<mosaic_0001>
module attributes {stable_mosaic.version = 11 : i64} {
  func.func @dqn_kernel(%arg0: i32, %arg1: memref<8x16xbf16, #tpu.memory_space<vmem>>, %arg2: memref<16x128xbf16, #tpu.memory_space<vmem>>, %arg3: memref<1x128xf32, #tpu.memory_space<vmem>>, %arg4: memref<128x128xbf16, #tpu.memory_space<vmem>>, %arg5: memref<1x128xf32, #tpu.memory_space<vmem>>, %arg6: memref<128x128xbf16, #tpu.memory_space<vmem>>, %arg7: memref<1x128xf32, #tpu.memory_space<vmem>>, %arg8: memref<8x128xbf16, #tpu.memory_space<vmem>>) attributes {dimension_semantics = [#tpu.dimension_semantics<parallel>], iteration_bounds = array<i64: 1>, scalar_prefetch = 0 : i64, scratch_operands = 0 : i64, tpu.core_type = #tpu.core_type<tc>, window_params = [{transform_indices = @transform_0, window_bounds = array<i64: 8, 16>}, {pipeline_mode = #tpu.pipeline_mode<synchronous>, transform_indices = @transform_1, window_bounds = array<i64: 16, 128>}, {pipeline_mode = #tpu.pipeline_mode<synchronous>, transform_indices = @transform_2, window_bounds = array<i64: 1, 128>}, {pipeline_mode = #tpu.pipeline_mode<synchronous>, transform_indices = @transform_3, window_bounds = array<i64: 128, 128>}, {pipeline_mode = #tpu.pipeline_mode<synchronous>, transform_indices = @transform_4, window_bounds = array<i64: 1, 128>}, {pipeline_mode = #tpu.pipeline_mode<synchronous>, transform_indices = @transform_5, window_bounds = array<i64: 128, 128>}, {pipeline_mode = #tpu.pipeline_mode<synchronous>, transform_indices = @transform_6, window_bounds = array<i64: 1, 128>}, {transform_indices = @transform_7, window_bounds = array<i64: 8, 128>}]} {
    %c0 = arith.constant 0 : index
    %c0_0 = arith.constant 0 : index
    %0 = vector.load %arg1[%c0, %c0_0] : memref<8x16xbf16, #tpu.memory_space<vmem>>, vector<8x16xbf16>
    %c0_1 = arith.constant 0 : index
    %c0_2 = arith.constant 0 : index
    %1 = vector.load %arg2[%c0_1, %c0_2] : memref<16x128xbf16, #tpu.memory_space<vmem>>, vector<16x128xbf16>
    %cst = arith.constant dense<0.000000e+00> : vector<8x128xf32>
    %2 = tpu.matmul %0, %1, %cst {dimension_numbers = #tpu.dot_dimension_numbers<[1], [0], [0], [1], [0, 0, 1, 1], [], []>} : vector<8x16xbf16>, vector<16x128xbf16>, vector<8x128xf32> -> vector<8x128xf32>
    %c0_3 = arith.constant 0 : index
    %c0_4 = arith.constant 0 : index
    %3 = vector.load %arg3[%c0_3, %c0_4] : memref<1x128xf32, #tpu.memory_space<vmem>>, vector<1x128xf32>
    %4 = vector.broadcast %3 : vector<1x128xf32> to vector<8x128xf32>
    %5 = arith.addf %2, %4 : vector<8x128xf32>
    %cst_5 = arith.constant 0.000000e+00 : f32
    %6 = vector.broadcast %cst_5 : f32 to vector<8x128xf32>
    %7 = arith.maximumf %5, %6 : vector<8x128xf32>
    %8 = arith.truncf %7 : vector<8x128xf32> to vector<8x128xbf16>
    %c0_6 = arith.constant 0 : index
    %c0_7 = arith.constant 0 : index
    %9 = vector.load %arg4[%c0_6, %c0_7] : memref<128x128xbf16, #tpu.memory_space<vmem>>, vector<128x128xbf16>
    %cst_8 = arith.constant dense<0.000000e+00> : vector<8x128xf32>
    %10 = tpu.matmul %8, %9, %cst_8 {dimension_numbers = #tpu.dot_dimension_numbers<[1], [0], [0], [1], [0, 0, 1, 1], [], []>} : vector<8x128xbf16>, vector<128x128xbf16>, vector<8x128xf32> -> vector<8x128xf32>
    %c0_9 = arith.constant 0 : index
    %c0_10 = arith.constant 0 : index
    %11 = vector.load %arg5[%c0_9, %c0_10] : memref<1x128xf32, #tpu.memory_space<vmem>>, vector<1x128xf32>
    %12 = vector.broadcast %11 : vector<1x128xf32> to vector<8x128xf32>
    %13 = arith.addf %10, %12 : vector<8x128xf32>
    %cst_11 = arith.constant 0.000000e+00 : f32
    %14 = vector.broadcast %cst_11 : f32 to vector<8x128xf32>
    %15 = arith.maximumf %13, %14 : vector<8x128xf32>
    %16 = arith.truncf %15 : vector<8x128xf32> to vector<8x128xbf16>
    %c0_12 = arith.constant 0 : index
    %c0_13 = arith.constant 0 : index
    %17 = vector.load %arg6[%c0_12, %c0_13] : memref<128x128xbf16, #tpu.memory_space<vmem>>, vector<128x128xbf16>
    %cst_14 = arith.constant dense<0.000000e+00> : vector<8x128xf32>
    %18 = tpu.matmul %16, %17, %cst_14 {dimension_numbers = #tpu.dot_dimension_numbers<[1], [0], [0], [1], [0, 0, 1, 1], [], []>} : vector<8x128xbf16>, vector<128x128xbf16>, vector<8x128xf32> -> vector<8x128xf32>
    %c0_15 = arith.constant 0 : index
    %c0_16 = arith.constant 0 : index
    %19 = vector.load %arg7[%c0_15, %c0_16] : memref<1x128xf32, #tpu.memory_space<vmem>>, vector<1x128xf32>
    %20 = vector.broadcast %19 : vector<1x128xf32> to vector<8x128xf32>
    %21 = arith.addf %18, %20 : vector<8x128xf32>
    %22 = arith.truncf %21 : vector<8x128xf32> to vector<8x128xbf16>
    %c0_17 = arith.constant 0 : index
    %c0_18 = arith.constant 0 : index
    %23 = vector.load %arg8[%c0_17, %c0_18] : memref<8x128xbf16, #tpu.memory_space<vmem>>, vector<8x128xbf16>
    tpu.vector_store %arg8[%c0_17, %c0_18], %22 {strides = array<i32>} : memref<8x128xbf16, #tpu.memory_space<vmem>>, vector<8x128xbf16>,
    return
  }
  func.func @transform_0(%arg0: i32) -> (i32, i32) {
    %c0_i32 = arith.constant 0 : i32
    %c0_i32_0 = arith.constant 0 : i32
    return %arg0, %c0_i32 : i32, i32
  }
  func.func @transform_1(%arg0: i32) -> (i32, i32) {
    %c0_i32 = arith.constant 0 : i32
    %c0_i32_0 = arith.constant 0 : i32
    %c0_i32_1 = arith.constant 0 : i32
    return %c0_i32, %c0_i32_0 : i32, i32
  }
  func.func @transform_2(%arg0: i32) -> (i32, i32) {
    %c0_i32 = arith.constant 0 : i32
    %c0_i32_0 = arith.constant 0 : i32
    %c0_i32_1 = arith.constant 0 : i32
    return %c0_i32, %c0_i32_0 : i32, i32
  }
  func.func @transform_3(%arg0: i32) -> (i32, i32) {
    %c0_i32 = arith.constant 0 : i32
    %c0_i32_0 = arith.constant 0 : i32
    %c0_i32_1 = arith.constant 0 : i32
    return %c0_i32, %c0_i32_0 : i32, i32
  }
  func.func @transform_4(%arg0: i32) -> (i32, i32) {
    %c0_i32 = arith.constant 0 : i32
    %c0_i32_0 = arith.constant 0 : i32
    %c0_i32_1 = arith.constant 0 : i32
    return %c0_i32, %c0_i32_0 : i32, i32
  }
  func.func @transform_5(%arg0: i32) -> (i32, i32) {
    %c0_i32 = arith.constant 0 : i32
    %c0_i32_0 = arith.constant 0 : i32
    %c0_i32_1 = arith.constant 0 : i32
    return %c0_i32, %c0_i32_0 : i32, i32
  }
  func.func @transform_6(%arg0: i32) -> (i32, i32) {
    %c0_i32 = arith.constant 0 : i32
    %c0_i32_0 = arith.constant 0 : i32
    %c0_i32_1 = arith.constant 0 : i32
    return %c0_i32, %c0_i32_0 : i32, i32
  }
  func.func @transform_7(%arg0: i32) -> (i32, i32) {
    %c0_i32 = arith.constant 0 : i32
    %c0_i32_0 = arith.constant 0 : i32
    return %arg0, %c0_i32 : i32, i32
  }
}

</mosaic_0001>

<llo_original>
// kernel: dqn_forward.1
$region0: #{dqn_forward.1}
  #allocation0 [shape = 'u32[]', space=smem, size = 0x4, offset = 0x4, fixed_abs, tag = 'smem constant byte address 0x4 - core index']
  #allocation1 [shape = 'u32[144,128]{1,0:T(1,128)}', space=vmem, size = 0x12000, scoped, tag = 'internal scratch']
  %s0 = inlined_call_operand.vmem [shape: bf16[8,16], index: 0, kind: input, shape index: {}]
  %s1 = inlined_call_operand.vmem [shape: bf16[16,128], index: 1, kind: input, shape index: {}]
  %s2 = inlined_call_operand.vmem [shape: f32[1,128], index: 2, kind: input, shape index: {}]
  %s3 = inlined_call_operand.hbm [shape: bf16[128,128], index: 3, kind: input, shape index: {}]
  %s4 = inlined_call_operand.vmem [shape: f32[1,128], index: 4, kind: input, shape index: {}]
  %s5 = inlined_call_operand.hbm [shape: bf16[128,128], index: 5, kind: input, shape index: {}]
  %s6 = inlined_call_operand.vmem [shape: f32[1,128], index: 6, kind: input, shape index: {}]
  %s7 = inlined_call_operand.vmem [shape: bf16[8,128], index: 7, kind: output, shape index: {}]
  %s8 = sld [smem:[#allocation0]]
  $region46: #{dqn_forward.1} parent=0
    _
  %s10 = ssub.s32 1, %s8
  %s11 = scalar_select 0, %s10, %s8
  $region1: #{dqn_forward.1} parent=0
    #allocation2 [shape = 'u8[32768]{0}', space=vmem, size = 0x8000, scoped, tag = 'input window, operand 3, single buffered']
    #allocation3 [shape = 's32[1]{0}', space=sflag, size = 0x4, scoped, tag = 'scoped memory for dqn_forward.1']
    #allocation4 [shape = 'u8[32768]{0}', space=vmem, size = 0x8000, scoped, tag = 'input window, operand 5, single buffered']
    #allocation5 [shape = 's32[1]{0}', space=sflag, size = 0x4, scoped, tag = 'scoped memory for dqn_forward.1']
    %12 = vsyncpa [#allocation3], 0
    %13 = vsyncpa [#allocation5], 0
    // Predicated region
    $region2: #{dqn_forward.1} parent=1 // pred_check
      _
    $region3: #{dqn_forward.1} parent=1 // pred_check_branch
      %15 = sbr.rel (0) target = $region5
    $region4: #{dqn_forward.1} parent=1 // pred_region
      _
    $region5: #{dqn_forward.1} parent=1 // pred_fallthru
      _
    // Predicated region
    $region6: #{dqn_forward.1} parent=1 // pred_check
      _
    $region7: #{dqn_forward.1} parent=1 // pred_check_branch
      %17 = sbr.rel (0) target = $region9
    $region8: #{dqn_forward.1} parent=1 // pred_region
      _
    $region9: #{dqn_forward.1} parent=1 // pred_fallthru
      _
    // Predicated region
    $region10: #{dqn_forward.1} parent=1 // pred_check
      _
    $region11: #{dqn_forward.1} parent=1 // pred_check_branch
      %19 = sbr.rel (0) target = $region13
    $region12: #{dqn_forward.1} parent=1 // pred_region
      _
    $region13: #{dqn_forward.1} parent=1 // pred_fallthru
      _
    // Predicated region
    $region14: #{dqn_forward.1} parent=1 // pred_check
      _
    $region15: #{dqn_forward.1} parent=1 // pred_check_branch
      %21 = sbr.rel (0) target = $region17
    $region16: #{dqn_forward.1} parent=1 // pred_region
      %s23 = ssub.s32 1024, 1024
      %24 = vsyncadd [#allocation3], %s23
      %s25 = sshll.u32 [#allocation2], 4
      %s26 = int_to_ptr.vmem [resolvable:$true] %s25
      %31 = dma.hbm_to_vmem [thread:$0]  %s3, 1024, %s26, [#allocation3], 64, 64, 4
    $region17: #{dqn_forward.1} parent=1 // pred_fallthru
      _
    // Predicated region
    $region18: #{dqn_forward.1} parent=1 // pred_check
      _
    $region19: #{dqn_forward.1} parent=1 // pred_check_branch
      %33 = sbr.rel (0) target = $region21
    $region20: #{dqn_forward.1} parent=1 // pred_region
      _
    $region21: #{dqn_forward.1} parent=1 // pred_fallthru
      _
    // Predicated region
    $region22: #{dqn_forward.1} parent=1 // pred_check
      _
    $region23: #{dqn_forward.1} parent=1 // pred_check_branch
      %35 = sbr.rel (0) target = $region25
    $region24: #{dqn_forward.1} parent=1 // pred_region
      %s37 = ssub.s32 1024, 1024
      %38 = vsyncadd [#allocation5], %s37
      %s39 = sshll.u32 [#allocation4], 4
      %s40 = int_to_ptr.vmem [resolvable:$true] %s39
      %45 = dma.hbm_to_vmem [thread:$0]  %s5, 1024, %s40, [#allocation5], 64, 64, 4
    $region25: #{dqn_forward.1} parent=1 // pred_fallthru
      _
    // Predicated region
    $region26: #{dqn_forward.1} parent=1 // pred_check
      _
    $region27: #{dqn_forward.1} parent=1 // pred_check_branch
      %47 = sbr.rel (0) target = $region29
    $region28: #{dqn_forward.1} parent=1 // pred_region
      _
    $region29: #{dqn_forward.1} parent=1 // pred_fallthru
      _
    // Predicated region
    $region30: #{dqn_forward.1} parent=1 // pred_check
      _
    $region31: #{dqn_forward.1} parent=1 // pred_check_branch
      %49 = sbr.rel (0) target = $region33
    $region32: #{dqn_forward.1} parent=1 // pred_region
      %50 = dma.done [#allocation3], 1024
    $region33: #{dqn_forward.1} parent=1 // pred_fallthru
      _
    // Predicated region
    $region34: #{dqn_forward.1} parent=1 // pred_check
      _
    $region35: #{dqn_forward.1} parent=1 // pred_check_branch
      %52 = sbr.rel (0) target = $region37
    $region36: #{dqn_forward.1} parent=1 // pred_region
      %53 = dma.done [#allocation5], 1024
    $region37: #{dqn_forward.1} parent=1 // pred_fallthru
      _
    %v55 = vld [vmem:[%s0] sm:$0xf]
    %v56 = vld [vmem:[%s1] sm:$0xf]
    %v57 = vld [vmem:[%s1 + $0x4] sm:$0xf]
    %v58 = vld [vmem:[%s2] sm:$0x1]
    %v60 = vlaneseq
    %v61 = vshrl.u32 %v60, 7
    %v62 = vsub.s32 0, %v61
    %v63 = vrot.slane %v58, %v62
    %v67 = vunpack.c.l.b16 %v56
    %v68 = vunpack.c.l.b16 %v57
    %v69 = vpack.c.b16 %v68, %v67
    %vm71 = vcmask 130048
    %v73 = vsel %vm71, %v55, 0
    %75 = vmatprep.subr.bf16.mxu0 0
    %76 = vmatpush1.bf16.msra.mxu0 %v69
    %77 = vmatprep.subr.bf16.mxu0 0
    %78 = vmatpush1.bf16.msra.mxu0 0
    %79 = vmatprep.subr.bf16.mxu0 0
    %80 = vmatpush1.bf16.msra.mxu0 0
    %81 = vmatprep.subr.bf16.mxu0 0
    %82 = vmatpush1.bf16.msra.mxu0 0
    %83 = vmatprep.subr.bf16.mxu0 0
    %84 = vmatpush1.bf16.msra.mxu0 0
    %85 = vmatprep.subr.bf16.mxu0 0
    %86 = vmatpush1.bf16.msra.mxu0 0
    %87 = vmatprep.subr.bf16.mxu0 0
    %88 = vmatpush1.bf16.msra.mxu0 0
    %89 = vmatprep.subr.bf16.mxu0 0
    %90 = vmatpush1.bf16.msra.mxu0 0
    %91 = vmatprep.subr.bf16.mxu0 0
    %92 = vmatpush1.bf16.msra.mxu0 0
    %93 = vmatprep.subr.bf16.mxu0 0
    %94 = vmatpush1.bf16.msra.mxu0 0
    %95 = vmatprep.subr.bf16.mxu0 0
    %96 = vmatpush1.bf16.msra.mxu0 0
    %97 = vmatprep.subr.bf16.mxu0 0
    %98 = vmatpush1.bf16.msra.mxu0 0
    %99 = vmatprep.subr.bf16.mxu0 0
    %100 = vmatpush1.bf16.msra.mxu0 0
    %101 = vmatprep.subr.bf16.mxu0 0
    %102 = vmatpush1.bf16.msra.mxu0 0
    %103 = vmatprep.subr.bf16.mxu0 0
    %104 = vmatpush1.bf16.msra.mxu0 0
    %105 = vmatprep.subr.bf16.mxu0 0
    %106 = vmatpush1.bf16.msra.mxu0 0
    %107 = vmatprep.mubr.bf16.mxu0 0
    %108 = vmatmul.mubr.bf16.gmra.mrb[0].mxu0 %v73
    %v109 = vpop.f32.mrb[0].mxu0
    %v110 = vadd.f32 %v63, %v109
    %v111 = vpop.f32.mrb[0].mxu0
    %v112 = vpop.f32.mrb[0].mxu0
    %v113 = vpop.f32.mrb[0].mxu0
    %114 = vdwg.mxu0
    %v115 = vmax.f32 %v110, 0.0
    %v116 = vpack.c.bf16 %v115, %v115
    %v117 = vld [vmem:[#allocation2] sm:$0xf]
    %v118 = vld [vmem:[#allocation2 + $0x4] sm:$0xf]
    %v119 = vld [vmem:[#allocation2 + $0x8] sm:$0xf]
    %v120 = vld [vmem:[#allocation2 + $0xc] sm:$0xf]
    %v121 = vld [vmem:[#allocation2 + $0x10] sm:$0xf]
    %v122 = vld [vmem:[#allocation2 + $0x14] sm:$0xf]
    %v123 = vld [vmem:[#allocation2 + $0x18] sm:$0xf]
    %v124 = vld [vmem:[#allocation2 + $0x1c] sm:$0xf]
    %v125 = vld [vmem:[#allocation2 + $0x20] sm:$0xf]
    %v126 = vld [vmem:[#allocation2 + $0x24] sm:$0xf]
    %v127 = vld [vmem:[#allocation2 + $0x28] sm:$0xf]
    %v128 = vld [vmem:[#allocation2 + $0x2c] sm:$0xf]
    %v129 = vld [vmem:[#allocation2 + $0x30] sm:$0xf]
    %v130 = vld [vmem:[#allocation2 + $0x34] sm:$0xf]
    %v131 = vld [vmem:[#allocation2 + $0x38] sm:$0xf]
    %v132 = vld [vmem:[#allocation2 + $0x3c] sm:$0xf]
    %v133 = vld [vmem:[%s4] sm:$0x1]
    %v135 = vlaneseq
    %v136 = vshrl.u32 %v135, 7
    %v137 = vsub.s32 0, %v136
    %v138 = vrot.slane %v133, %v137
    %v156 = vunpack.c.l.b16 %v117
    %v157 = vunpack.c.l.b16 %v118
    %v158 = vunpack.c.l.b16 %v119
    %v159 = vunpack.c.l.b16 %v120
    %v160 = vunpack.c.l.b16 %v121
    %v161 = vunpack.c.l.b16 %v122
    %v162 = vunpack.c.l.b16 %v123
    %v163 = vunpack.c.l.b16 %v124
    %v164 = vunpack.c.l.b16 %v125
    %v165 = vunpack.c.l.b16 %v126
    %v166 = vunpack.c.l.b16 %v127
    %v167 = vunpack.c.l.b16 %v128
    %v168 = vunpack.c.l.b16 %v129
    %v169 = vunpack.c.l.b16 %v130
    %v170 = vunpack.c.l.b16 %v131
    %v171 = vunpack.c.l.b16 %v132
    %v172 = vpack.c.b16 %v157, %v156
    %v173 = vpack.c.b16 %v159, %v158
    %v174 = vpack.c.b16 %v161, %v160
    %v175 = vpack.c.b16 %v163, %v162
    %v176 = vpack.c.b16 %v165, %v164
    %v177 = vpack.c.b16 %v167, %v166
    %v178 = vpack.c.b16 %v169, %v168
    %v179 = vpack.c.b16 %v171, %v170
    %188 = vmatprep.subr.bf16.mxu0 0
    %189 = vmatpush1.bf16.msra.mxu0 %v172
    %190 = vmatprep.subr.bf16.mxu0 0
    %191 = vmatpush1.bf16.msra.mxu0 %v173
    %192 = vmatprep.subr.bf16.mxu0 0
    %193 = vmatpush1.bf16.msra.mxu0 %v174
    %194 = vmatprep.subr.bf16.mxu0 0
    %195 = vmatpush1.bf16.msra.mxu0 %v175
    %196 = vmatprep.subr.bf16.mxu0 0
    %197 = vmatpush1.bf16.msra.mxu0 %v176
    %198 = vmatprep.subr.bf16.mxu0 0
    %199 = vmatpush1.bf16.msra.mxu0 %v177
    %200 = vmatprep.subr.bf16.mxu0 0
    %201 = vmatpush1.bf16.msra.mxu0 %v178
    %202 = vmatprep.subr.bf16.mxu0 0
    %203 = vmatpush1.bf16.msra.mxu0 %v179
    %204 = vmatprep.subr.bf16.mxu0 0
    %205 = vmatpush1.bf16.msra.mxu0 0
    %206 = vmatprep.subr.bf16.mxu0 0
    %207 = vmatpush1.bf16.msra.mxu0 0
    %208 = vmatprep.subr.bf16.mxu0 0
    %209 = vmatpush1.bf16.msra.mxu0 0
    %210 = vmatprep.subr.bf16.mxu0 0
    %211 = vmatpush1.bf16.msra.mxu0 0
    %212 = vmatprep.subr.bf16.mxu0 0
    %213 = vmatpush1.bf16.msra.mxu0 0
    %214 = vmatprep.subr.bf16.mxu0 0
    %215 = vmatpush1.bf16.msra.mxu0 0
    %216 = vmatprep.subr.bf16.mxu0 0
    %217 = vmatpush1.bf16.msra.mxu0 0
    %218 = vmatprep.subr.bf16.mxu0 0
    %219 = vmatpush1.bf16.msra.mxu0 0
    %220 = vmatprep.mubr.bf16.mxu0 0
    %221 = vmatmul.mubr.bf16.gmra.mrb[0].mxu0 %v116
    %v222 = vpop.f32.mrb[0].mxu0
    %v223 = vadd.f32 %v138, %v222
    %v224 = vpop.f32.mrb[0].mxu0
    %v225 = vpop.f32.mrb[0].mxu0
    %v226 = vpop.f32.mrb[0].mxu0
    %227 = vdwg.mxu0
    %v228 = vmax.f32 %v223, 0.0
    %v229 = vpack.c.bf16 %v228, %v228
    %v230 = vld [vmem:[#allocation4] sm:$0xf]
    %v231 = vld [vmem:[#allocation4 + $0x4] sm:$0xf]
    %v232 = vld [vmem:[#allocation4 + $0x8] sm:$0xf]
    %v233 = vld [vmem:[#allocation4 + $0xc] sm:$0xf]
    %v234 = vld [vmem:[#allocation4 + $0x10] sm:$0xf]
    %v235 = vld [vmem:[#allocation4 + $0x14] sm:$0xf]
    %v236 = vld [vmem:[#allocation4 + $0x18] sm:$0xf]
    %v237 = vld [vmem:[#allocation4 + $0x1c] sm:$0xf]
    %v238 = vld [vmem:[#allocation4 + $0x20] sm:$0xf]
    %v239 = vld [vmem:[#allocation4 + $0x24] sm:$0xf]
    %v240 = vld [vmem:[#allocation4 + $0x28] sm:$0xf]
    %v241 = vld [vmem:[#allocation4 + $0x2c] sm:$0xf]
    %v242 = vld [vmem:[#allocation4 + $0x30] sm:$0xf]
    %v243 = vld [vmem:[#allocation4 + $0x34] sm:$0xf]
    %v244 = vld [vmem:[#allocation4 + $0x38] sm:$0xf]
    %v245 = vld [vmem:[#allocation4 + $0x3c] sm:$0xf]
    %v246 = vld [vmem:[%s6] sm:$0x1]
    %v248 = vlaneseq
    %v249 = vshrl.u32 %v248, 7
    %v250 = vsub.s32 0, %v249
    %v251 = vrot.slane %v246, %v250
    %v269 = vunpack.c.l.b16 %v230
    %v270 = vunpack.c.l.b16 %v231
    %v271 = vunpack.c.l.b16 %v232
    %v272 = vunpack.c.l.b16 %v233
    %v273 = vunpack.c.l.b16 %v234
    %v274 = vunpack.c.l.b16 %v235
    %v275 = vunpack.c.l.b16 %v236
    %v276 = vunpack.c.l.b16 %v237
    %v277 = vunpack.c.l.b16 %v238
    %v278 = vunpack.c.l.b16 %v239
    %v279 = vunpack.c.l.b16 %v240
    %v280 = vunpack.c.l.b16 %v241
    %v281 = vunpack.c.l.b16 %v242
    %v282 = vunpack.c.l.b16 %v243
    %v283 = vunpack.c.l.b16 %v244
    %v284 = vunpack.c.l.b16 %v245
    %v285 = vpack.c.b16 %v270, %v269
    %v286 = vpack.c.b16 %v272, %v271
    %v287 = vpack.c.b16 %v274, %v273
    %v288 = vpack.c.b16 %v276, %v275
    %v289 = vpack.c.b16 %v278, %v277
    %v290 = vpack.c.b16 %v280, %v279
    %v291 = vpack.c.b16 %v282, %v281
    %v292 = vpack.c.b16 %v284, %v283
    %301 = vmatprep.subr.bf16.mxu0 0
    %302 = vmatpush1.bf16.msra.mxu0 %v285
    %303 = vmatprep.subr.bf16.mxu0 0
    %304 = vmatpush1.bf16.msra.mxu0 %v286
    %305 = vmatprep.subr.bf16.mxu0 0
    %306 = vmatpush1.bf16.msra.mxu0 %v287
    %307 = vmatprep.subr.bf16.mxu0 0
    %308 = vmatpush1.bf16.msra.mxu0 %v288
    %309 = vmatprep.subr.bf16.mxu0 0
    %310 = vmatpush1.bf16.msra.mxu0 %v289
    %311 = vmatprep.subr.bf16.mxu0 0
    %312 = vmatpush1.bf16.msra.mxu0 %v290
    %313 = vmatprep.subr.bf16.mxu0 0
    %314 = vmatpush1.bf16.msra.mxu0 %v291
    %315 = vmatprep.subr.bf16.mxu0 0
    %316 = vmatpush1.bf16.msra.mxu0 %v292
    %317 = vmatprep.subr.bf16.mxu0 0
    %318 = vmatpush1.bf16.msra.mxu0 0
    %319 = vmatprep.subr.bf16.mxu0 0
    %320 = vmatpush1.bf16.msra.mxu0 0
    %321 = vmatprep.subr.bf16.mxu0 0
    %322 = vmatpush1.bf16.msra.mxu0 0
    %323 = vmatprep.subr.bf16.mxu0 0
    %324 = vmatpush1.bf16.msra.mxu0 0
    %325 = vmatprep.subr.bf16.mxu0 0
    %326 = vmatpush1.bf16.msra.mxu0 0
    %327 = vmatprep.subr.bf16.mxu0 0
    %328 = vmatpush1.bf16.msra.mxu0 0
    %329 = vmatprep.subr.bf16.mxu0 0
    %330 = vmatpush1.bf16.msra.mxu0 0
    %331 = vmatprep.subr.bf16.mxu0 0
    %332 = vmatpush1.bf16.msra.mxu0 0
    %333 = vmatprep.mubr.bf16.mxu0 0
    %334 = vmatmul.mubr.bf16.gmra.mrb[0].mxu0 %v229
    %v335 = vpop.f32.mrb[0].mxu0
    %v336 = vadd.f32 %v251, %v335
    %v337 = vpop.f32.mrb[0].mxu0
    %v338 = vpop.f32.mrb[0].mxu0
    %v339 = vpop.f32.mrb[0].mxu0
    %340 = vdwg.mxu0
    %v341 = vpack.c.bf16 %v336, %v336
    %342 = vst [vmem:[%s7] sm:$0xf] %v341
    // Predicated region
    $region38: #{dqn_forward.1} parent=1 // pred_check
      _
    $region39: #{dqn_forward.1} parent=1 // pred_check_branch
      %344 = sbr.rel (0) target = $region41
    $region40: #{dqn_forward.1} parent=1 // pred_region
      _
    $region41: #{dqn_forward.1} parent=1 // pred_fallthru
      _
    // Predicated region
    $region42: #{dqn_forward.1} parent=1 // pred_check
      _
    $region43: #{dqn_forward.1} parent=1 // pred_check_branch
      %346 = sbr.rel (0) target = $region45
    $region44: #{dqn_forward.1} parent=1 // pred_region
      _
    $region45: #{dqn_forward.1} parent=1 // pred_fallthru
      _
    %347 = vsyncpa [#allocation3], 1
    %348 = vsyncpa [#allocation5], 1

</llo_original>
